<compile_context>
chip_gen: v7x
topology: tpu7x:2x2x1
jax: 0.10.0
libtpu: 0.0.40
codegen_flags: <defaults>
</compile_context>

<pallas_src>
import functools

import jax
import jax.numpy as jnp
from jax.experimental import pallas as pl
from jax.experimental.pallas import tpu as pltpu


def _group_fused_kernel(x_ref, wa_ref, w2_ref, b2_ref, o_ref, *, k, wp, lc, cin, cout):
    # x_ref : (1, 1, Cin+1, Lc_in) bf16  input row-chunk (+halo); last channel is the
    #                                    interior mask (folds conv_a bias, zeroes pad).
    # wa_ref: (2*Cin, Cin+1)       bf16  conv_a weight with bias as last column.
    # w2_ref: (k, 2*Cout, k*Cin)   bf16  kxk conv weight, kw taps stacked into K.
    # b2_ref: (2*Cout, 1)          f32
    # o_ref : (1, 1, Cout, Lc)     f32   stride-1 conv output for this row chunk.
    x = x_ref[0, 0]                                                     # (Cin+1, Lc_in)

    # ---- block 1: fused 1x1 conv_a (+bias via mask channel) + MFM -----------------
    a = jnp.dot(wa_ref[...], x, preferred_element_type=jnp.float32)     # (2*Cin, Lc_in)
    a = jnp.maximum(a[:cin], a[cin:]).astype(jnp.bfloat16)              # (Cin,  Lc_in)

    # ---- block 2: kxk conv as k fat matmuls (K = k*Cin) over kw-stacked shifts ----
    lstack = lc + (k - 1) * wp
    a_stack = jnp.concatenate([a[:, kw:kw + lstack] for kw in range(k)], axis=0)

    acc = None
    for kh in range(k):
        part = jnp.dot(w2_ref[kh], a_stack[:, kh * wp:kh * wp + lc],
                       preferred_element_type=jnp.float32)              # (2*Cout, Lc)
        acc = part if acc is None else acc + part
    y = acc + b2_ref[...]

    # MFM: channel-split max on sublanes (VPU), lane-dense store.
    o_ref[0, 0] = jnp.maximum(y[:cout], y[cout:]).astype(o_ref.dtype)


def group_forward(x, params, *, kernel_size, stride, padding, row_tile=None):
    """group: conv_a = mfm(Cin, Cin, 1, 1, 0); conv = mfm(Cin, Cout, k, s, p). NCHW."""
    N, Cin, H, W = x.shape
    k, s, p = kernel_size, stride, padding
    Cout = params["w"].shape[0] // 2
    assert params["wa"].shape[0] == 2 * Cin

    Hp, Wp = H + 2 * p, W + 2 * p
    Hs1 = Hp - k + 1                      # stride-1 conv output rows
    Hout = (Hp - k) // s + 1
    Wout = (Wp - k) // s + 1
    assert k - 1 <= Wp

    # --- output-row tiling ---------------------------------------------------------
    if row_tile is None:
        row_tile = max(1, min(Hs1, max(1, 1024 // Wp)))   # ~1K output lanes per chunk
    th = min(row_tile, Hs1)
    n_chunks = -(-Hs1 // th)
    hs1_pad = n_chunks * th
    h_rows = hs1_pad + k                  # padded rows so every chunk + halo is in range
    lc_in = (th + k) * Wp                 # per-chunk input lanes (rows + halo)
    lc = th * Wp                          # per-chunk output lanes

    # --- padded, mask-augmented input ------------------------------------------------
    pad_top, pad_bot = p, h_rows - p - H
    xpad = jnp.pad(x, ((0, 0), (0, 0), (pad_top, pad_bot), (p, p)))     # (N,Cin,h_rows,Wp)
    rows = jnp.arange(h_rows)
    cols = jnp.arange(Wp)
    interior = (((rows >= p) & (rows < p + H))[:, None] &
                ((cols >= p) & (cols < p + W))[None, :]).astype(x.dtype)
    mask = jnp.broadcast_to(interior, (N, 1, h_rows, Wp))
    x_aug = jnp.concatenate([xpad, mask], axis=1).astype(jnp.bfloat16)  # (N,Cin+1,h_rows,Wp)

    # Overlapping row chunks (halo duplicated in HBM) -> plain BlockSpec pipelining,
    # no dynamic in-kernel slicing; both grid axes stay "parallel".
    x_chunks = jnp.stack(
        [x_aug[:, :, t * th: t * th + th + k, :] for t in range(n_chunks)],
        axis=1).reshape(N, n_chunks, Cin + 1, lc_in)

    # --- weights ---------------------------------------------------------------------
    wa = params["wa"].reshape(2 * Cin, Cin)
    ba = params["ba"].reshape(2 * Cin, 1)
    wa_aug = jnp.concatenate([wa, ba], axis=1).astype(jnp.bfloat16)      # (2Cin, Cin+1)

    w2 = jnp.transpose(params["w"], (2, 3, 1, 0))                        # (k,k,Cin,2Cout)
    w2 = w2.reshape(k, k * Cin, 2 * Cout)
    w2 = jnp.transpose(w2, (0, 2, 1)).astype(jnp.bfloat16)               # (k,2Cout,kCin)
    b2 = params["b"].reshape(2 * Cout, 1).astype(jnp.float32)

    # --- cost estimate / VMEM budgeting -----------------------------------------------
    flops = 2 * N * n_chunks * ((Cin + 1) * 2 * Cin * lc_in
                                + k * (k * Cin) * (2 * Cout) * lc)
    bytes_accessed = (x_chunks.size * 2 + N * n_chunks * Cout * lc * 4
                      + wa_aug.size * 2 + w2.size * 2 + b2.size * 4)

    x_chunk_b = (Cin + 1) * lc_in * 2
    out_chunk_b = Cout * lc * 4
    weights_b = wa_aug.size * 2 + w2.size * 2 + b2.size * 4
    work_b = (2 * Cin * lc_in * 4 + Cin * lc_in * 2
              + k * Cin * (lc + (k - 1) * Wp) * 2 + 2 * (2 * Cout) * lc * 4)
    vmem_est = 2 * (x_chunk_b + out_chunk_b) + weights_b + work_b
    vmem_limit = None
    if vmem_est > 8 * 2**20:   # only override the default scoped limit when needed
        vmem_limit = int(min(max(2 * vmem_est, 16 * 2**20), 48 * 2**20))

    out_chunks = pl.pallas_call(
        functools.partial(_group_fused_kernel, k=k, wp=Wp, lc=lc, cin=Cin, cout=Cout),
        out_shape=jax.ShapeDtypeStruct((N, n_chunks, Cout, lc), jnp.float32),
        grid_spec=pltpu.PrefetchScalarGridSpec(
            num_scalar_prefetch=0,
            grid=(N, n_chunks),
            in_specs=[
                pl.BlockSpec((1, 1, Cin + 1, lc_in), lambda n, t: (n, t, 0, 0)),
                pl.BlockSpec((2 * Cin, Cin + 1), lambda n, t: (0, 0)),
                pl.BlockSpec((k, 2 * Cout, k * Cin), lambda n, t: (0, 0, 0)),
                pl.BlockSpec((2 * Cout, 1), lambda n, t: (0, 0)),
            ],
            out_specs=pl.BlockSpec((1, 1, Cout, lc), lambda n, t: (n, t, 0, 0)),
        ),
        compiler_params=pltpu.CompilerParams(
            dimension_semantics=("parallel", "parallel"),
            vmem_limit_bytes=vmem_limit),
        cost_estimate=pl.CostEstimate(flops=flops, transcendentals=0,
                                      bytes_accessed=bytes_accessed),
    )(x_chunks, wa_aug, w2, b2)

    # (N, n_chunks, Cout, TH*Wp) -> (N, Cout, Hs1_pad, Wp); trim padded-width junk
    # columns / padded rows and apply the conv stride (stride handled wrapper-side).
    out = out_chunks.reshape(N, n_chunks, Cout, th, Wp)
    out = jnp.transpose(out, (0, 2, 1, 3, 4)).reshape(N, Cout, hs1_pad, Wp)
    out = out[:, :, :(Hout - 1) * s + 1:s, :(Wout - 1) * s + 1:s]
    return out


def _reference_group(x, params, *, kernel_size, stride, padding):
    """Pure-JAX reference (lax conv) mirroring the PyTorch semantics."""
    def mfm_ref(x, w, b, ss, pp, cout):
        y = jax.lax.conv_general_dilated(
            x, w, window_strides=(ss, ss), padding=[(pp, pp), (pp, pp)],
            dimension_numbers=("NCHW", "OIHW", "NCHW"))
        y = y + b.reshape(1, -1, 1, 1)
        return jnp.maximum(y[:, :cout], y[:, cout:])

    x = mfm_ref(x, params["wa"], params["ba"], 1, 0, params["wa"].shape[0] // 2)
    x = mfm_ref(x, params["w"], params["b"], stride, padding,
                params["w"].shape[0] // 2)
    return x


if __name__ == "__main__":
    # Small shapes consistent with the module.
    N, Cin, H, W = 2, 4, 16, 16
    Cout, k, s, p = 8, 3, 1, 1

    key = jax.random.PRNGKey(0)
    kx, kwa, kba, kw, kb = jax.random.split(key, 5)

    x = jax.random.normal(kx, (N, Cin, H, W), dtype=jnp.float32)
    params = {
        # conv_a: Conv2d(Cin, 2*Cin, kernel_size=1)
        "wa": 0.1 * jax.random.normal(kwa, (2 * Cin, Cin, 1, 1), dtype=jnp.float32),
        "ba": 0.1 * jax.random.normal(kba, (2 * Cin,), dtype=jnp.float32),
        # conv:   Conv2d(Cin, 2*Cout, kernel_size=k, stride=s, padding=p)
        "w": 0.1 * jax.random.normal(kw, (2 * Cout, Cin, k, k), dtype=jnp.float32),
        "b": 0.1 * jax.random.normal(kb, (2 * Cout,), dtype=jnp.float32),
    }

    # row_tile=8 exercises the multi-chunk (batch x row-chunk) grid path.
    fwd = jax.jit(functools.partial(group_forward, kernel_size=k, stride=s,
                                    padding=p, row_tile=8))
    out = jax.block_until_ready(fwd(x, params))

    ref = _reference_group(x, params, kernel_size=k, stride=s, padding=p)
    assert out.shape == (N, Cout, H, W), out.shape
    # bf16 matmul operands -> slightly looser tolerance than pure-f32.
    assert jnp.allclose(out, ref, atol=5e-2, rtol=5e-2), "mismatch vs reference"

    print("KERNEL_OK")
</pallas_src>

<mosaic_0001>
module attributes {stable_mosaic.version = 11 : i64} {
  func.func @_group_fused_kernel(%arg0: i32, %arg1: i32, %arg2: memref<1x1x5x198xbf16, #tpu.memory_space<vmem>>, %arg3: memref<8x5xbf16, #tpu.memory_space<vmem>>, %arg4: memref<3x16x12xbf16, #tpu.memory_space<vmem>>, %arg5: memref<16x1xf32, #tpu.memory_space<vmem>>, %arg6: memref<1x1x8x144xf32, #tpu.memory_space<vmem>>) attributes {dimension_semantics = [#tpu.dimension_semantics<parallel>, #tpu.dimension_semantics<parallel>], iteration_bounds = array<i64: 2, 2>, scalar_prefetch = 0 : i64, scratch_operands = 0 : i64, tpu.core_type = #tpu.core_type<tc>, window_params = [{transform_indices = @transform_0, window_bounds = array<i64: 1, 1, 5, 198>}, {pipeline_mode = #tpu.pipeline_mode<synchronous>, transform_indices = @transform_1, window_bounds = array<i64: 8, 5>}, {pipeline_mode = #tpu.pipeline_mode<synchronous>, transform_indices = @transform_2, window_bounds = array<i64: 3, 16, 12>}, {pipeline_mode = #tpu.pipeline_mode<synchronous>, transform_indices = @transform_3, window_bounds = array<i64: 16, 1>}, {transform_indices = @transform_4, window_bounds = array<i64: 1, 1, 8, 144>}]} {
    %c0 = arith.constant 0 : index
    %c0_0 = arith.constant 0 : index
    %c0_1 = arith.constant 0 : index
    %c0_2 = arith.constant 0 : index
    %0 = vector.load %arg2[%c0, %c0_0, %c0_1, %c0_2] : memref<1x1x5x198xbf16, #tpu.memory_space<vmem>>, vector<1x1x5x198xbf16>
    %1 = vector.shape_cast %0 : vector<1x1x5x198xbf16> to vector<5x198xbf16>
    %c0_3 = arith.constant 0 : index
    %c0_4 = arith.constant 0 : index
    %2 = vector.load %arg3[%c0_3, %c0_4] : memref<8x5xbf16, #tpu.memory_space<vmem>>, vector<8x5xbf16>
    %cst = arith.constant dense<0.000000e+00> : vector<8x198xf32>
    %3 = tpu.matmul %2, %1, %cst {dimension_numbers = #tpu.dot_dimension_numbers<[1], [0], [0], [1], [0, 0, 1, 1], [], []>} : vector<8x5xbf16>, vector<5x198xbf16>, vector<8x198xf32> -> vector<8x198xf32>
    %4 = vector.extract_strided_slice %3 {offsets = [0, 0], sizes = [4, 198], strides = [1, 1]} : vector<8x198xf32> to vector<4x198xf32>
    %5 = vector.extract_strided_slice %3 {offsets = [4, 0], sizes = [4, 198], strides = [1, 1]} : vector<8x198xf32> to vector<4x198xf32>
    %6 = arith.maximumf %4, %5 : vector<4x198xf32>
    %7 = arith.truncf %6 : vector<4x198xf32> to vector<4x198xbf16>
    %8 = vector.extract_strided_slice %7 {offsets = [0, 0], sizes = [4, 180], strides = [1, 1]} : vector<4x198xbf16> to vector<4x180xbf16>
    %9 = vector.extract_strided_slice %7 {offsets = [0, 1], sizes = [4, 180], strides = [1, 1]} : vector<4x198xbf16> to vector<4x180xbf16>
    %10 = vector.extract_strided_slice %7 {offsets = [0, 2], sizes = [4, 180], strides = [1, 1]} : vector<4x198xbf16> to vector<4x180xbf16>
    %11 = tpu.concatenate %8, %9, %10 in 0 : vector<4x180xbf16>, vector<4x180xbf16>, vector<4x180xbf16> -> vector<12x180xbf16>
    %c0_5 = arith.constant 0 : index
    %c0_6 = arith.constant 0 : index
    %c0_7 = arith.constant 0 : index
    %12 = vector.load %arg4[%c0_5, %c0_6, %c0_7] : memref<3x16x12xbf16, #tpu.memory_space<vmem>>, vector<1x16x12xbf16>
    %13 = vector.shape_cast %12 : vector<1x16x12xbf16> to vector<16x12xbf16>
    %14 = vector.extract_strided_slice %11 {offsets = [0, 0], sizes = [12, 144], strides = [1, 1]} : vector<12x180xbf16> to vector<12x144xbf16>
    %cst_8 = arith.constant dense<0.000000e+00> : vector<16x144xf32>
    %15 = tpu.matmul %13, %14, %cst_8 {dimension_numbers = #tpu.dot_dimension_numbers<[1], [0], [0], [1], [0, 0, 1, 1], [], []>} : vector<16x12xbf16>, vector<12x144xbf16>, vector<16x144xf32> -> vector<16x144xf32>
    %c1 = arith.constant 1 : index
    %c0_9 = arith.constant 0 : index
    %c0_10 = arith.constant 0 : index
    %16 = vector.load %arg4[%c1, %c0_9, %c0_10] : memref<3x16x12xbf16, #tpu.memory_space<vmem>>, vector<1x16x12xbf16>
    %17 = vector.shape_cast %16 : vector<1x16x12xbf16> to vector<16x12xbf16>
    %18 = vector.extract_strided_slice %11 {offsets = [0, 18], sizes = [12, 144], strides = [1, 1]} : vector<12x180xbf16> to vector<12x144xbf16>
    %cst_11 = arith.constant dense<0.000000e+00> : vector<16x144xf32>
    %19 = tpu.matmul %17, %18, %cst_11 {dimension_numbers = #tpu.dot_dimension_numbers<[1], [0], [0], [1], [0, 0, 1, 1], [], []>} : vector<16x12xbf16>, vector<12x144xbf16>, vector<16x144xf32> -> vector<16x144xf32>
    %20 = arith.addf %15, %19 : vector<16x144xf32>
    %c2 = arith.constant 2 : index
    %c0_12 = arith.constant 0 : index
    %c0_13 = arith.constant 0 : index
    %21 = vector.load %arg4[%c2, %c0_12, %c0_13] : memref<3x16x12xbf16, #tpu.memory_space<vmem>>, vector<1x16x12xbf16>
    %22 = vector.shape_cast %21 : vector<1x16x12xbf16> to vector<16x12xbf16>
    %23 = vector.extract_strided_slice %11 {offsets = [0, 36], sizes = [12, 144], strides = [1, 1]} : vector<12x180xbf16> to vector<12x144xbf16>
    %cst_14 = arith.constant dense<0.000000e+00> : vector<16x144xf32>
    %24 = tpu.matmul %22, %23, %cst_14 {dimension_numbers = #tpu.dot_dimension_numbers<[1], [0], [0], [1], [0, 0, 1, 1], [], []>} : vector<16x12xbf16>, vector<12x144xbf16>, vector<16x144xf32> -> vector<16x144xf32>
    %25 = arith.addf %20, %24 : vector<16x144xf32>
    %c0_15 = arith.constant 0 : index
    %c0_16 = arith.constant 0 : index
    %26 = vector.load %arg5[%c0_15, %c0_16] : memref<16x1xf32, #tpu.memory_space<vmem>>, vector<16x1xf32>
    %27 = vector.broadcast %26 : vector<16x1xf32> to vector<16x144xf32>
    %28 = arith.addf %25, %27 : vector<16x144xf32>
    %29 = vector.extract_strided_slice %28 {offsets = [0, 0], sizes = [8, 144], strides = [1, 1]} : vector<16x144xf32> to vector<8x144xf32>
    %30 = vector.extract_strided_slice %28 {offsets = [8, 0], sizes = [8, 144], strides = [1, 1]} : vector<16x144xf32> to vector<8x144xf32>
    %31 = arith.maximumf %29, %30 : vector<8x144xf32>
    %c0_17 = arith.constant 0 : index
    %c0_18 = arith.constant 0 : index
    %c0_19 = arith.constant 0 : index
    %c0_20 = arith.constant 0 : index
    %32 = vector.load %arg6[%c0_17, %c0_18, %c0_19, %c0_20] : memref<1x1x8x144xf32, #tpu.memory_space<vmem>>, vector<1x1x8x144xf32>
    %33 = vector.shape_cast %32 : vector<1x1x8x144xf32> to vector<8x144xf32>
    %34 = vector.shape_cast %31 : vector<8x144xf32> to vector<1x1x8x144xf32>
    tpu.vector_store %arg6[%c0_17, %c0_18, %c0_19, %c0_20], %34 {strides = array<i32>} : memref<1x1x8x144xf32, #tpu.memory_space<vmem>>, vector<1x1x8x144xf32>,
    return
  }
  func.func @transform_0(%arg0: i32, %arg1: i32) -> (i32, i32, i32, i32) {
    %c0_i32 = arith.constant 0 : i32
    %c0_i32_0 = arith.constant 0 : i32
    %c0_i32_1 = arith.constant 0 : i32
    return %arg0, %arg1, %c0_i32, %c0_i32_0 : i32, i32, i32, i32
  }
  func.func @transform_1(%arg0: i32, %arg1: i32) -> (i32, i32) {
    %c0_i32 = arith.constant 0 : i32
    %c0_i32_0 = arith.constant 0 : i32
    %c0_i32_1 = arith.constant 0 : i32
    return %c0_i32, %c0_i32_0 : i32, i32
  }
  func.func @transform_2(%arg0: i32, %arg1: i32) -> (i32, i32, i32) {
    %c0_i32 = arith.constant 0 : i32
    %c0_i32_0 = arith.constant 0 : i32
    %c0_i32_1 = arith.constant 0 : i32
    %c0_i32_2 = arith.constant 0 : i32
    return %c0_i32, %c0_i32_0, %c0_i32_1 : i32, i32, i32
  }
  func.func @transform_3(%arg0: i32, %arg1: i32) -> (i32, i32) {
    %c0_i32 = arith.constant 0 : i32
    %c0_i32_0 = arith.constant 0 : i32
    %c0_i32_1 = arith.constant 0 : i32
    return %c0_i32, %c0_i32_0 : i32, i32
  }
  func.func @transform_4(%arg0: i32, %arg1: i32) -> (i32, i32, i32, i32) {
    %c0_i32 = arith.constant 0 : i32
    %c0_i32_0 = arith.constant 0 : i32
    %c0_i32_1 = arith.constant 0 : i32
    return %arg0, %arg1, %c0_i32, %c0_i32_0 : i32, i32, i32, i32
  }
}

</mosaic_0001>

<llo_original>
// kernel: group_forward.1
$region0: #{group_forward.1}
  #allocation0 [shape = 'u32[]', space=smem, size = 0x4, offset = 0x4, fixed_abs, tag = 'smem constant byte address 0x4 - core index']
  #allocation1 [shape = 'u32[144,128]{1,0:T(1,128)}', space=vmem, size = 0x12000, scoped, tag = 'internal scratch']
  %s0 = inlined_call_operand.vmem [shape: bf16[2,2,5,198], index: 0, kind: input, shape index: {}]
  %s1 = inlined_call_operand.vmem [shape: bf16[8,5], index: 1, kind: input, shape index: {}]
  %s2 = inlined_call_operand.vmem [shape: bf16[3,16,12], index: 2, kind: input, shape index: {}]
  %s3 = inlined_call_operand.vmem [shape: f32[16,1], index: 3, kind: input, shape index: {}]
  %s4 = inlined_call_operand.vmem [shape: f32[2,2,8,144], index: 4, kind: output, shape index: {}]
  %s5 = sld [smem:[#allocation0]]
  $region49: #{group_forward.1} parent=0
    _
  %s7 = ssub.s32 1, %s5
  %s8 = scalar_select 0, %s7, %s5
  loop: start=0, step=1, limit=6
  $region2: #{group_forward.1} parent=0 // loop_pre_header
    _
  $region3: #{group_forward.1} parent=0 // loop_header
    %s10 = sphi 0, %s14
    %p11 = scmp.ge.s32.totalorder %s10, 6
    %s17 = sphi 0, %s29
    %s18 = sphi 0, %s25
    %s19 = sphi 0, %s17
    %s20 = sphi 0, %s18
    %s21 = sphi 0, %s19
    %s22 = sphi 0, %s20
    %s34 = sphi 0, %s36
    %s37 = sphi 0, %s34
    %s38 = sphi 0, %s37
    %s54 = sphi 0, %s38
    %s58 = sphi 0, %s58
    %s60 = sphi 0, %s58
    %s61 = sphi 0, %s60
    %s75 = sphi 0, %s61
    %s79 = sphi 0, %s79
    %s81 = sphi 0, %s79
    %s82 = sphi 0, %s81
    %s96 = sphi 0, %s82
    %s100 = sphi 0, %s100
    %s102 = sphi 0, %s100
    %s103 = sphi 0, %s102
    %s117 = sphi 0, %s103
    %s125 = sphi 0, %s127
    %s128 = sphi 0, %s125
    %s129 = sphi 0, %s128
    %s145 = sphi 0, %s129
  $region4: #{group_forward.1} parent=0 // loop_header_branch
    %13 = sbr.rel (%p11) target = $region8
  $region5: #{group_forward.1} parent=0 // loop_body
    %s15 = ssub.s32 %s10, 1
    %s16 = ssub.s32 %s10, 2
    %s23 = sadd.s32 1, %s18
    %p24 = scmp.ge.s32.totalorder %s23, 2
    %s25 = scalar_select %p24, 0, %s23
    %s26 = sadd.s32 1, %s17
    %s27 = scalar_select %p24, %s26, %s17
    %p28 = scmp.ge.s32.totalorder %s27, 2
    %s29 = scalar_select %p28, 0, %s27
    %s30 = ssub.s32 %s17, %s29
    %s31 = ssub.s32 %s18, %s25
    %s32 = sor.u32 %s30, %s31
    %p33 = scmp.eq.s32.totalorder %s32, 0
    %s35 = sadd.s32 %s34, 1
    %s36 = scalar_select %p33, %s34, %s35
    %p39 = pneg %p33
    %p40 = scmp.eq.s32.totalorder %s10, 3
    %p41 = por %p39, %p40
    %p42 = scmp.ne.s32.totalorder %s34, %s37
    %p43 = scmp.eq.s32.totalorder %s10, 0
    %p44 = por %p42, %p43
    %p45 = scmp.ne.s32.totalorder %s34, %s37
    %p46 = scmp.eq.s32.totalorder %s15, 3
    %p47 = por %p45, %p46
    %p48 = scmp.ne.s32.totalorder %s37, %s38
    %p49 = scmp.eq.s32.totalorder %s15, 0
    %p50 = por %p48, %p49
    %p51 = scmp.ne.s32.totalorder %s37, %s38
    %p52 = scmp.eq.s32.totalorder %s16, 3
    %p53 = por %p51, %p52
    %p55 = scmp.ne.s32.totalorder %s38, %s54
    %p56 = scmp.eq.s32.totalorder %s16, 0
    %p57 = por %p55, %p56
    %s59 = sadd.s32 %s58, 1
    %p62 = scmp.eq.s32.totalorder %s10, 3
    %p63 = scmp.ne.s32.totalorder %s58, %s60
    %p64 = scmp.eq.s32.totalorder %s10, 0
    %p65 = por %p63, %p64
    %p66 = scmp.ne.s32.totalorder %s58, %s60
    %p67 = scmp.eq.s32.totalorder %s15, 3
    %p68 = por %p66, %p67
    %p69 = scmp.ne.s32.totalorder %s60, %s61
    %p70 = scmp.eq.s32.totalorder %s15, 0
    %p71 = por %p69, %p70
    %p72 = scmp.ne.s32.totalorder %s60, %s61
    %p73 = scmp.eq.s32.totalorder %s16, 3
    %p74 = por %p72, %p73
    %p76 = scmp.ne.s32.totalorder %s61, %s75
    %p77 = scmp.eq.s32.totalorder %s16, 0
    %p78 = por %p76, %p77
    %s80 = sadd.s32 %s79, 1
    %p83 = scmp.eq.s32.totalorder %s10, 3
    %p84 = scmp.ne.s32.totalorder %s79, %s81
    %p85 = scmp.eq.s32.totalorder %s10, 0
    %p86 = por %p84, %p85
    %p87 = scmp.ne.s32.totalorder %s79, %s81
    %p88 = scmp.eq.s32.totalorder %s15, 3
    %p89 = por %p87, %p88
    %p90 = scmp.ne.s32.totalorder %s81, %s82
    %p91 = scmp.eq.s32.totalorder %s15, 0
    %p92 = por %p90, %p91
    %p93 = scmp.ne.s32.totalorder %s81, %s82
    %p94 = scmp.eq.s32.totalorder %s16, 3
    %p95 = por %p93, %p94
    %p97 = scmp.ne.s32.totalorder %s82, %s96
    %p98 = scmp.eq.s32.totalorder %s16, 0
    %p99 = por %p97, %p98
    %s101 = sadd.s32 %s100, 1
    %p104 = scmp.eq.s32.totalorder %s10, 3
    %p105 = scmp.ne.s32.totalorder %s100, %s102
    %p106 = scmp.eq.s32.totalorder %s10, 0
    %p107 = por %p105, %p106
    %p108 = scmp.ne.s32.totalorder %s100, %s102
    %p109 = scmp.eq.s32.totalorder %s15, 3
    %p110 = por %p108, %p109
    %p111 = scmp.ne.s32.totalorder %s102, %s103
    %p112 = scmp.eq.s32.totalorder %s15, 0
    %p113 = por %p111, %p112
    %p114 = scmp.ne.s32.totalorder %s102, %s103
    %p115 = scmp.eq.s32.totalorder %s16, 3
    %p116 = por %p114, %p115
    %p118 = scmp.ne.s32.totalorder %s103, %s117
    %p119 = scmp.eq.s32.totalorder %s16, 0
    %p120 = por %p118, %p119
    %s121 = ssub.s32 %s17, %s29
    %s122 = ssub.s32 %s18, %s25
    %s123 = sor.u32 %s121, %s122
    %p124 = scmp.eq.s32.totalorder %s123, 0
    %s126 = sadd.s32 %s125, 1
    %s127 = scalar_select %p124, %s125, %s126
    %p130 = pneg %p124
    %p131 = scmp.eq.s32.totalorder %s10, 3
    %p132 = por %p130, %p131
    %p133 = scmp.ne.s32.totalorder %s125, %s128
    %p134 = scmp.eq.s32.totalorder %s10, 0
    %p135 = por %p133, %p134
    %p136 = scmp.ne.s32.totalorder %s125, %s128
    %p137 = scmp.eq.s32.totalorder %s15, 3
    %p138 = por %p136, %p137
    %p139 = scmp.ne.s32.totalorder %s128, %s129
    %p140 = scmp.eq.s32.totalorder %s15, 0
    %p141 = por %p139, %p140
    %p142 = scmp.ne.s32.totalorder %s128, %s129
    %p143 = scmp.eq.s32.totalorder %s16, 3
    %p144 = por %p142, %p143
    %p146 = scmp.ne.s32.totalorder %s129, %s145
    %p147 = scmp.eq.s32.totalorder %s16, 0
    %p148 = por %p146, %p147
    %p149 = scmp.le.s32.totalorder 1, %s10
    %p150 = scmp.lt.s32.totalorder %s10, 5
    %p151 = pnand %p149, %p150
    %p152 = pneg %p151
    // Predicated region
    $region9: #{group_forward.1} parent=5 // pred_check
      _
    $region10: #{group_forward.1} parent=5 // pred_check_branch
      %154 = sbr.rel (%p151) target = $region12
    $region11: #{group_forward.1} parent=5 // pred_region
      %s155 = ssub.s32 %s10, 1
      // Predicated region
      $region13: #{group_forward.1} parent=11 // pred_check
        %p156 = pneg %p71
      $region14: #{group_forward.1} parent=11 // pred_check_branch
        %158 = sbr.rel (%p156) target = $region16
      $region15: #{group_forward.1} parent=11 // pred_region
        _
      $region16: #{group_forward.1} parent=11 // pred_fallthru
        _
      // Predicated region
      $region17: #{group_forward.1} parent=11 // pred_check
        %p159 = pneg %p92
      $region18: #{group_forward.1} parent=11 // pred_check_branch
        %161 = sbr.rel (%p159) target = $region20
      $region19: #{group_forward.1} parent=11 // pred_region
        _
      $region20: #{group_forward.1} parent=11 // pred_fallthru
        _
      // Predicated region
      $region21: #{group_forward.1} parent=11 // pred_check
        %p162 = pneg %p113
      $region22: #{group_forward.1} parent=11 // pred_check_branch
        %164 = sbr.rel (%p162) target = $region24
      $region23: #{group_forward.1} parent=11 // pred_region
        _
      $region24: #{group_forward.1} parent=11 // pred_fallthru
        _
    $region12: #{group_forward.1} parent=5 // pred_fallthru
      _
    %p165 = scmp.lt.s32.totalorder %s10, 4
    // Predicated region
    $region25: #{group_forward.1} parent=5 // pred_check
      %p166 = pneg %p165
    $region26: #{group_forward.1} parent=5 // pred_check_branch
      %168 = sbr.rel (%p166) target = $region28
    $region27: #{group_forward.1} parent=5 // pred_region
      // Predicated region
      $region29: #{group_forward.1} parent=27 // pred_check
        %p169 = pneg %p44
      $region30: #{group_forward.1} parent=27 // pred_check_branch
        %171 = sbr.rel (%p169) target = $region32
      $region31: #{group_forward.1} parent=27 // pred_region
        %p172 = scmp.lt.s32.totalorder %s17, 1
        %s173 = scalar_select %p172, %s17, 1
        %p174 = scmp.lt.s32.totalorder %s18, 1
        %s175 = scalar_select %p174, %s18, 1
        %s176 = smul.addr %s175, 2
        %s177 = smul.addr %s173, 4
        %s178 = sadd.s32 %s176, %s177
        %s179 = smul.addr %s178, 4
        %s180 = scalar_lea.vmem %s0, %s179
      $region32: #{group_forward.1} parent=27 // pred_fallthru
        _
    $region28: #{group_forward.1} parent=5 // pred_fallthru
      _
    %p181 = scmp.le.s32.totalorder 1, %s10
    %p182 = scmp.lt.s32.totalorder %s10, 5
    %p183 = pnand %p181, %p182
    %p184 = pneg %p183
    // Predicated region
    $region33: #{group_forward.1} parent=5 // pred_check
      _
    $region34: #{group_forward.1} parent=5 // pred_check_branch
      %186 = sbr.rel (%p183) target = $region36
    $region35: #{group_forward.1} parent=5 // pred_region
      %s187 = ssub.s32 %s10, 1
      %p188 = scmp.lt.s32.totalorder %s19, 1
      %s189 = scalar_select %p188, %s19, 1
      %p190 = scmp.lt.s32.totalorder %s20, 1
      %s191 = scalar_select %p190, %s20, 1
      %s192 = smul.addr %s191, 2
      %s193 = smul.addr %s189, 4
      %s194 = sadd.s32 %s192, %s193
      %s195 = smul.addr %s194, 4
      %s196 = scalar_lea.vmem %s0, %s195
      %p197 = pneg %p50
      %p198 = pneg %p47
      %p199 = pneg %p71
      %p200 = pneg %p68
      %p201 = pneg %p92
      %p202 = pneg %p89
      %p203 = pneg %p113
      %p204 = pneg %p110
      %p205 = pneg %p141
      %p206 = pneg %p138
      %p207 = scmp.lt.s32.totalorder %s19, 1
      %s208 = scalar_select %p207, %s19, 1
      %p209 = scmp.lt.s32.totalorder %s20, 1
      %s210 = scalar_select %p209, %s20, 1
      %s211 = smul.addr %s210, 2
      %s212 = smul.addr %s208, 4
      %s213 = sadd.s32 %s211, %s212
      %s214 = smul.addr %s213, 8
      %s215 = scalar_lea.vmem %s4, %s214
      %p216 = scmp.lt.s32.totalorder %s19, 1
      %s217 = scalar_select %p216, %s19, 1
      %p218 = scmp.lt.s32.totalorder %s20, 1
      %s219 = scalar_select %p218, %s20, 1
      %s220 = smul.addr %s219, 2
      %s221 = smul.addr %s217, 4
      %s222 = sadd.s32 %s220, %s221
      %s223 = smul.addr %s222, 4
      %s224 = scalar_lea.vmem %s0, %s223
      %p225 = scmp.lt.s32.totalorder %s19, 1
      %s226 = scalar_select %p225, %s19, 1
      %p227 = scmp.lt.s32.totalorder %s20, 1
      %s228 = scalar_select %p227, %s20, 1
      %s229 = smul.addr %s228, 2
      %s230 = smul.addr %s226, 4
      %s231 = sadd.s32 %s229, %s230
      %s232 = smul.addr %s231, 8
      %s233 = scalar_lea.vmem %s4, %s232
      %v235 = vld [vmem:[%s224] sm:$0x77]
      %v236 = vld [vmem:[%s1] sm:$0xf]
      %v238 = vunpack.c.l.b16 %v235
      %v239 = vunpack.c.h.b16 %v235
      %v240 = vpack.c.b16 %v238, %v238
      %v241 = vpack.c.b16 %v239, %v239
      %vm242 = vcmask 39936
      %v244 = vsel %vm242, %v236, 0
      %vm246 = vcmask 1041408
      %vm247 = vcmask 1042432
      %v248 = vsel %vm246, 4294967295, 65535
      %v249 = vsel %vm247, %v248, 0
      %v251 = vand.u32 %v240, %v249
      %v254 = vand.u32 %v241, %v249
      %256 = vmatprep.subr.bf16.mxu0 %v254
      %257 = vmatpush1.bf16.msra.mxu0 %v251
      %258 = vmatprep.subr.bf16.mxu0 0
      %259 = vmatpush1.bf16.msra.mxu0 0
      %260 = vmatprep.subr.bf16.mxu0 0
      %261 = vmatpush1.bf16.msra.mxu0 0
      %262 = vmatprep.subr.bf16.mxu0 0
      %263 = vmatpush1.bf16.msra.mxu0 0
      %264 = vmatprep.subr.bf16.mxu0 0
      %265 = vmatpush1.bf16.msra.mxu0 0
      %266 = vmatprep.subr.bf16.mxu0 0
      %267 = vmatpush1.bf16.msra.mxu0 0
      %268 = vmatprep.subr.bf16.mxu0 0
      %269 = vmatpush1.bf16.msra.mxu0 0
      %270 = vmatprep.subr.bf16.mxu0 0
      %271 = vmatpush1.bf16.msra.mxu0 0
      %272 = vmatprep.subr.bf16.mxu0 0
      %273 = vmatpush1.bf16.msra.mxu0 0
      %274 = vmatprep.subr.bf16.mxu0 0
      %275 = vmatpush1.bf16.msra.mxu0 0
      %276 = vmatprep.subr.bf16.mxu0 0
      %277 = vmatpush1.bf16.msra.mxu0 0
      %278 = vmatprep.subr.bf16.mxu0 0
      %279 = vmatpush1.bf16.msra.mxu0 0
      %280 = vmatprep.subr.bf16.mxu0 0
      %281 = vmatpush1.bf16.msra.mxu0 0
      %282 = vmatprep.subr.bf16.mxu0 0
      %283 = vmatpush1.bf16.msra.mxu0 0
      %284 = vmatprep.subr.bf16.mxu0 0
      %285 = vmatpush1.bf16.msra.mxu0 0
      %286 = vmatprep.subr.bf16.mxu0 0
      %287 = vmatpush1.bf16.msra.mxu0 0
      %288 = vmatprep.mubr.bf16.mxu0 0
      %289 = vmatmul.mubr.bf16.gmra.mrb[0].mxu0 %v244
      %v290 = vpop.f32.mrb[0].mxu0
      %v291 = vadd.f32 0.0, %v290
      %v292 = vpop.f32.mrb[0].mxu0
      %v293 = vadd.f32 0.0, %v292
      %v294 = vpop.f32.mrb[0].mxu0
      %v295 = vpop.f32.mrb[0].mxu0
      %296 = vdwg.mxu0
      %v299 = vrot.slane %v291, 4
      %v300 = vrot.slane %v293, 4
      %v303 = vmax.f32 %v291, %v299
      %v304 = vmax.f32 %v293, %v300
      %v305 = vpack.c.bf16 %v303, %v303
      %v306 = vpack.c.bf16 %v304, %v304
      %v309 = vrot.slane %v305, 6
      %v310 = vrot.slane %v306, 6
      %311 = vrot.lane.b32.xlu0 %v309, 127
      %v312 = vpop.permute.xlu0 %311
      %313 = vrot.lane.b32.xlu0 %v310, 127
      %v314 = vpop.permute.xlu0 %313
      %vm315 = vcmask 1039360
      %v316 = vsel %vm315, %v312, %v314
      %v317 = vrot.slane %v305, 4
      %v318 = vrot.slane %v306, 4
      %319 = vrot.lane.b32.xlu0 %v317, 126
      %v320 = vpop.permute.xlu0 %319
      %321 = vrot.lane.b32.xlu0 %v318, 126
      %v322 = vpop.permute.xlu0 %321
      %vm323 = vcmask 1031168
      %v324 = vsel %vm323, %v320, %v322
      %v327 = vsel %vm246, %v305, %v316
      %v330 = vsel %vm246, %v306, %v314
      %vm331 = vcmask 1043456
      %v333 = vsel %vm331, %v327, %v324
      %v335 = vsel %vm331, %v330, %v322
      %v336 = vld [vmem:[%s2] sm:$0xf]
      %v337 = vld [vmem:[%s2 + $0x4] sm:$0xf]
      %s338 = scalar_lea.vmem %s2, 8
      %v339 = vld [vmem:[%s338] sm:$0xf]
      %v340 = vld [vmem:[%s338 + $0x4] sm:$0xf]
      %v343 = vunpack.c.l.b16 %v339
      %v344 = vunpack.c.l.b16 %v340
      %v345 = vpack.c.b16 %v344, %v343
      %348 = vrot.lane.b32.xlu0 %v333, 110
      %v349 = vpop.permute.xlu0 %348
      %350 = vrot.lane.b32.xlu0 %v335, 110
      %v351 = vpop.permute.xlu0 %350
      %vm352 = vcmask 900096
      %v353 = vsel %vm352, %v349, %v351
      %vm354 = vcmask 97280
      %v356 = vsel %vm354, %v345, 0
      %vm358 = vcmask 1045504
      %v360 = vsel %vm358, %v353, 0
      %v363 = vsel %vm358, %v351, 0
      %365 = vmatprep.subr.bf16.mxu0 %v363
      %366 = vmatpush1.bf16.msra.mxu0 %v360
      %367 = vmatprep.subr.bf16.mxu0 0
      %368 = vmatpush1.bf16.msra.mxu0 0
      %369 = vmatprep.subr.bf16.mxu0 0
      %370 = vmatpush1.bf16.msra.mxu0 0
      %371 = vmatprep.subr.bf16.mxu0 0
      %372 = vmatpush1.bf16.msra.mxu0 0
      %373 = vmatprep.subr.bf16.mxu0 0
      %374 = vmatpush1.bf16.msra.mxu0 0
      %375 = vmatprep.subr.bf16.mxu0 0
      %376 = vmatpush1.bf16.msra.mxu0 0
      %377 = vmatprep.subr.bf16.mxu0 0
      %378 = vmatpush1.bf16.msra.mxu0 0
      %379 = vmatprep.subr.bf16.mxu0 0
      %380 = vmatpush1.bf16.msra.mxu0 0
      %381 = vmatprep.subr.bf16.mxu0 0
      %382 = vmatpush1.bf16.msra.mxu0 0
      %383 = vmatprep.subr.bf16.mxu0 0
      %384 = vmatpush1.bf16.msra.mxu0 0
      %385 = vmatprep.subr.bf16.mxu0 0
      %386 = vmatpush1.bf16.msra.mxu0 0
      %387 = vmatprep.subr.bf16.mxu0 0
      %388 = vmatpush1.bf16.msra.mxu0 0
      %389 = vmatprep.subr.bf16.mxu0 0
      %390 = vmatpush1.bf16.msra.mxu0 0
      %391 = vmatprep.subr.bf16.mxu0 0
      %392 = vmatpush1.bf16.msra.mxu0 0
      %393 = vmatprep.subr.bf16.mxu0 0
      %394 = vmatpush1.bf16.msra.mxu0 0
      %395 = vmatprep.subr.bf16.mxu0 0
      %396 = vmatpush1.bf16.msra.mxu0 0
      %397 = vmatprep.mubr.bf16.mxu0 0
      %398 = vmatmul.mubr.bf16.gmra.mrb[0].mxu0 %v356
      %v399 = vpop.f32.mrb[0].mxu0
      %v400 = vadd.f32 0.0, %v399
      %v401 = vpop.f32.mrb[0].mxu0
      %v402 = vadd.f32 0.0, %v401
      %v403 = vpop.f32.mrb[0].mxu0
      %v404 = vadd.f32 0.0, %v403
      %v405 = vpop.f32.mrb[0].mxu0
      %v406 = vadd.f32 0.0, %v405
      %407 = vdwg.mxu0
      %v410 = vunpack.c.l.b16 %v336
      %v411 = vunpack.c.l.b16 %v337
      %v412 = vpack.c.b16 %v411, %v410
      %v414 = vsel %vm354, %v412, 0
      %v416 = vsel %vm358, %v333, 0
      %v418 = vsel %vm358, %v335, 0
      %420 = vmatprep.subr.bf16.mxu0 %v418
      %421 = vmatpush1.bf16.msra.mxu0 %v416
      %422 = vmatprep.subr.bf16.mxu0 0
      %423 = vmatpush1.bf16.msra.mxu0 0
      %424 = vmatprep.subr.bf16.mxu0 0
      %425 = vmatpush1.bf16.msra.mxu0 0
      %426 = vmatprep.subr.bf16.mxu0 0
      %427 = vmatpush1.bf16.msra.mxu0 0
      %428 = vmatprep.subr.bf16.mxu0 0
      %429 = vmatpush1.bf16.msra.mxu0 0
      %430 = vmatprep.subr.bf16.mxu0 0
      %431 = vmatpush1.bf16.msra.mxu0 0
      %432 = vmatprep.subr.bf16.mxu0 0
      %433 = vmatpush1.bf16.msra.mxu0 0
      %434 = vmatprep.subr.bf16.mxu0 0
      %435 = vmatpush1.bf16.msra.mxu0 0
      %436 = vmatprep.subr.bf16.mxu0 0
      %437 = vmatpush1.bf16.msra.mxu0 0
      %438 = vmatprep.subr.bf16.mxu0 0
      %439 = vmatpush1.bf16.msra.mxu0 0
      %440 = vmatprep.subr.bf16.mxu0 0
      %441 = vmatpush1.bf16.msra.mxu0 0
      %442 = vmatprep.subr.bf16.mxu0 0
      %443 = vmatpush1.bf16.msra.mxu0 0
      %444 = vmatprep.subr.bf16.mxu0 0
      %445 = vmatpush1.bf16.msra.mxu0 0
      %446 = vmatprep.subr.bf16.mxu0 0
      %447 = vmatpush1.bf16.msra.mxu0 0
      %448 = vmatprep.subr.bf16.mxu0 0
      %449 = vmatpush1.bf16.msra.mxu0 0
      %450 = vmatprep.subr.bf16.mxu0 0
      %451 = vmatpush1.bf16.msra.mxu0 0
      %452 = vmatprep.mubr.bf16.mxu0 0
      %453 = vmatmul.mubr.bf16.gmra.mrb[0].mxu0 %v414
      %v454 = vpop.f32.mrb[0].mxu0
      %v455 = vadd.f32 %v400, %v454
      %v456 = vpop.f32.mrb[0].mxu0
      %v457 = vadd.f32 %v402, %v456
      %v458 = vpop.f32.mrb[0].mxu0
      %v459 = vadd.f32 %v404, %v458
      %v460 = vpop.f32.mrb[0].mxu0
      %v461 = vadd.f32 %v406, %v460
      %462 = vdwg.mxu0
      %s463 = scalar_lea.vmem %s2, 16
      %v464 = vld [vmem:[%s463] sm:$0xf]
      %v465 = vld [vmem:[%s463 + $0x4] sm:$0xf]
      %v468 = vunpack.c.l.b16 %v464
      %v469 = vunpack.c.l.b16 %v465
      %v470 = vpack.c.b16 %v469, %v468
      %471 = vrot.lane.b32.xlu0 %v333, 92
      %v472 = vpop.permute.xlu0 %471
      %473 = vrot.lane.b32.xlu0 %v335, 92
      %v474 = vpop.permute.xlu0 %473
      %vm475 = vcmask 752640
      %v476 = vsel %vm475, %v472, %v474
      %v478 = vsel %vm354, %v470, 0
      %v481 = vsel %vm358, %v476, 0
      %v484 = vsel %vm358, %v474, 0
      %486 = vmatprep.subr.bf16.mxu0 %v484
      %487 = vmatpush1.bf16.msra.mxu0 %v481
      %488 = vmatprep.subr.bf16.mxu0 0
      %489 = vmatpush1.bf16.msra.mxu0 0
      %490 = vmatprep.subr.bf16.mxu0 0
      %491 = vmatpush1.bf16.msra.mxu0 0
      %492 = vmatprep.subr.bf16.mxu0 0
      %493 = vmatpush1.bf16.msra.mxu0 0
      %494 = vmatprep.subr.bf16.mxu0 0
      %495 = vmatpush1.bf16.msra.mxu0 0
      %496 = vmatprep.subr.bf16.mxu0 0
      %497 = vmatpush1.bf16.msra.mxu0 0
      %498 = vmatprep.subr.bf16.mxu0 0
      %499 = vmatpush1.bf16.msra.mxu0 0
      %500 = vmatprep.subr.bf16.mxu0 0
      %501 = vmatpush1.bf16.msra.mxu0 0
      %502 = vmatprep.subr.bf16.mxu0 0
      %503 = vmatpush1.bf16.msra.mxu0 0
      %504 = vmatprep.subr.bf16.mxu0 0
      %505 = vmatpush1.bf16.msra.mxu0 0
      %506 = vmatprep.subr.bf16.mxu0 0
      %507 = vmatpush1.bf16.msra.mxu0 0
      %508 = vmatprep.subr.bf16.mxu0 0
      %509 = vmatpush1.bf16.msra.mxu0 0
      %510 = vmatprep.subr.bf16.mxu0 0
      %511 = vmatpush1.bf16.msra.mxu0 0
      %512 = vmatprep.subr.bf16.mxu0 0
      %513 = vmatpush1.bf16.msra.mxu0 0
      %514 = vmatprep.subr.bf16.mxu0 0
      %515 = vmatpush1.bf16.msra.mxu0 0
      %516 = vmatprep.subr.bf16.mxu0 0
      %517 = vmatpush1.bf16.msra.mxu0 0
      %518 = vmatprep.mubr.bf16.mxu0 0
      %519 = vmatmul.mubr.bf16.gmra.mrb[0].mxu0 %v478
      %v520 = vpop.f32.mrb[0].mxu0
      %v521 = vadd.f32 0.0, %v520
      %v522 = vpop.f32.mrb[0].mxu0
      %v523 = vadd.f32 0.0, %v522
      %v524 = vpop.f32.mrb[0].mxu0
      %v525 = vadd.f32 0.0, %v524
      %v526 = vpop.f32.mrb[0].mxu0
      %v527 = vadd.f32 0.0, %v526
      %528 = vdwg.mxu0
      %v529 = vadd.f32 %v455, %v521
      %v530 = vadd.f32 %v457, %v523
      %v531 = vadd.f32 %v459, %v525
      %v532 = vadd.f32 %v461, %v527
      %v533 = vld [vmem:[%s3] sm:$0xff]
      %v534 = vld [vmem:[%s3 + $0x8] sm:$0xff]
      %536 = vset.pattern.permute.xlu0 0
      %537 = vperm.xlu0 %536, %v533
      %v538 = vpop.permute.xlu0 %537
      %541 = vset.pattern.permute.xlu0 0
      %542 = vperm.xlu0 %541, %v534
      %v543 = vpop.permute.xlu0 %542
      %v545 = vadd.f32 %v529, %v538
      %v546 = vadd.f32 %v530, %v538
      %v547 = vadd.f32 %v531, %v543
      %v548 = vadd.f32 %v532, %v543
      %v549 = vmax.f32 %v545, %v547
      %v550 = vmax.f32 %v546, %v548
      %551 = vst [vmem:[%s233] sm:$0xff] %v549
      %vm552 = vcmask 130048
      %553 = vst.msk [vmem:[%s233 + $0x8] sm:$0xff] %vm552, %v550
      %p554 = scmp.lt.s32.totalorder %s19, 1
      %s555 = scalar_select %p554, %s19, 1
      %p556 = scmp.lt.s32.totalorder %s20, 1
      %s557 = scalar_select %p556, %s20, 1
      %s558 = smul.addr %s557, 2
      %s559 = smul.addr %s555, 4
      %s560 = sadd.s32 %s558, %s559
      %s561 = smul.addr %s560, 8
      %s562 = scalar_lea.vmem %s4, %s561
      // Predicated region
      $region37: #{group_forward.1} parent=35 // pred_check
        %p563 = pneg %p138
      $region38: #{group_forward.1} parent=35 // pred_check_branch
        %565 = sbr.rel (%p563) target = $region40
      $region39: #{group_forward.1} parent=35 // pred_region
        _
      $region40: #{group_forward.1} parent=35 // pred_fallthru
        _
    $region36: #{group_forward.1} parent=5 // pred_fallthru
      _
    %p566 = scmp.le.s32.totalorder 2, %s10
    // Predicated region
    $region41: #{group_forward.1} parent=5 // pred_check
      %p567 = pneg %p566
    $region42: #{group_forward.1} parent=5 // pred_check_branch
      %569 = sbr.rel (%p567) target = $region44
    $region43: #{group_forward.1} parent=5 // pred_region
      %s570 = ssub.s32 %s10, 2
      // Predicated region
      $region45: #{group_forward.1} parent=43 // pred_check
        %p571 = pneg %p144
      $region46: #{group_forward.1} parent=43 // pred_check_branch
        %573 = sbr.rel (%p571) target = $region48
      $region47: #{group_forward.1} parent=43 // pred_region
        %p574 = scmp.lt.s32.totalorder %s21, 1
        %s575 = scalar_select %p574, %s21, 1
        %p576 = scmp.lt.s32.totalorder %s22, 1
        %s577 = scalar_select %p576, %s22, 1
        %s578 = smul.addr %s577, 2
        %s579 = smul.addr %s575, 4
        %s580 = sadd.s32 %s578, %s579
        %s581 = smul.addr %s580, 8
        %s582 = scalar_lea.vmem %s4, %s581
      $region48: #{group_forward.1} parent=43 // pred_fallthru
        _
    $region44: #{group_forward.1} parent=5 // pred_fallthru
      _
  $region6: #{group_forward.1} parent=0 // loop_footer
    %s14 = sadd.s32 1, %s10
  $region7: #{group_forward.1} parent=0 // loop_footer_branch
    %9 = sbr.rel target = $region3
  $region8: #{group_forward.1} parent=0 // loop_exit
    _

</llo_original>
